<compile_context>
chip_gen: v7x
topology: tpu7x:2x2x1
jax: 0.10.0
libtpu: 0.0.40
codegen_flags: <defaults>
</compile_context>

<pallas_src>
import functools

import jax
import jax.numpy as jnp
from jax.experimental import pallas as pl
from jax.experimental.pallas import tpu as pltpu


def _round_up(n, m):
    return ((n + m - 1) // m) * m


def _mish(x, approx_recip=False):
    # mish(x) = x * tanh(softplus(x)) = x * n / (n + 2),  n = e*(e+2), e = exp(x).
    # Exact rewrite: 1 exp + 1 reciprocal (both EUP) instead of exp+log1p+tanh.
    # Clamp before exp: for x >= 20 the factor is already 1 in f32, and
    # e^40 ~ 2.4e17 stays finite in f32 so n never overflows.
    e = jnp.exp(jnp.minimum(x, 20.0))
    n = e * (e + 2.0)
    return x * n * pl.reciprocal(n + 2.0, approx=approx_recip)


def _resnet_block_kernel(x_ref, w1_ref, b1_ref, w2_ref, b2_ref, o_ref, *,
                         approx_recip):
    # x_ref : (tm, H)  natural-layout batch tile (contiguous rows in HBM)
    # w*_ref: (H, H)   torch layout (out, in)  ->  h = W @ x_t
    # b*_ref: (H, 1)   column bias, broadcasts over the lane (batch) axis
    x_nat = x_ref[...].astype(jnp.float32)            # (tm, H)
    # Lane-dense compute layout: batch on the 128-lane axis, H on sublanes.
    # The transpose is XLU work — a free slot in this VPU/EUP/HBM-bound kernel.
    x_t = jnp.transpose(x_nat)                        # (H, tm)

    h = jnp.dot(w1_ref[...], _mish(x_t, approx_recip),
                preferred_element_type=jnp.float32) + b1_ref[...]
    h = jnp.dot(w2_ref[...], _mish(h, approx_recip),
                preferred_element_type=jnp.float32) + b2_ref[...]

    # Residual add in natural layout, then the (tm, H) store.
    o_ref[...] = (jnp.transpose(h) + x_nat).astype(o_ref.dtype)


@functools.partial(jax.jit, static_argnames=("tm", "fast_math"))
def two_layer_preact_resnet_linear(x, w1, b1, w2, b2, *, tm=2048,
                                   fast_math=False):
    """Pre-activation residual MLP block: x + l2(mish(l1(mish(x)))).

    x : [..., H] (any leading dims); w1, w2: [H, H] torch layout (out, in);
    b1, b2: [H].  No wrapper transpose / pad / slice: the kernel reads natural
    [B, H] tiles directly and the ragged last tile is masked by Pallas.
    """
    H = x.shape[-1]
    lead = x.shape[:-1]
    x2 = x.reshape(-1, H)            # collapse leading dims (no data movement)
    B = x2.shape[0]

    # Tile choice: as large as `tm` (amortise per-step overhead, big contiguous
    # DMAs), but capped so that (a) it never exceeds the batch and (b) the grid
    # has >= 2 steps when possible so both TensorCores are used on v7x.
    tm_eff = min(tm, _round_up(B, 8))
    if B > 128:
        tm_eff = min(tm_eff, _round_up(pl.cdiv(B, 2), 128))
    tm_eff = max(tm_eff, 8)
    grid = (pl.cdiv(B, tm_eff),)

    b1_c = b1.reshape(H, 1)
    b2_c = b2.reshape(H, 1)

    kernel = functools.partial(_resnet_block_kernel, approx_recip=fast_math)

    itemsize = jnp.dtype(x.dtype).itemsize
    cost = pl.CostEstimate(
        flops=4 * B * H * H + 12 * B * H,          # two 32x32 matmuls + eltwise
        transcendentals=2 * B * H,                 # two exp per element
        bytes_accessed=(2 * B * H + 2 * H * H + 2 * H) * itemsize,
    )

    out2 = pl.pallas_call(
        kernel,
        out_shape=jax.ShapeDtypeStruct((B, H), x.dtype),
        grid_spec=pltpu.PrefetchScalarGridSpec(
            num_scalar_prefetch=0,
            grid=grid,
            in_specs=[
                pl.BlockSpec((tm_eff, H), lambda i: (i, 0)),  # x tile (contiguous rows)
                pl.BlockSpec((H, H), lambda i: (0, 0)),       # W1 (resident)
                pl.BlockSpec((H, 1), lambda i: (0, 0)),       # b1 column
                pl.BlockSpec((H, H), lambda i: (0, 0)),       # W2 (resident)
                pl.BlockSpec((H, 1), lambda i: (0, 0)),       # b2 column
            ],
            out_specs=pl.BlockSpec((tm_eff, H), lambda i: (i, 0)),
        ),
        compiler_params=pltpu.CompilerParams(
            dimension_semantics=("parallel",)),    # shards grid across TCs on v7x
        cost_estimate=cost,
    )(x2, w1, b1_c, w2, b2_c)

    return out2.reshape(*lead, H)


def _reference(x, w1, b1, w2, b2):
    # Pure-JAX reference mirroring the PyTorch forward exactly.
    def mish(v):
        return v * jnp.tanh(jax.nn.softplus(v))
    h = mish(x) @ w1.T + b1
    h = mish(h) @ w2.T + b2
    return h + x


if __name__ == "__main__":
    hidden_dim = 32
    batch = 200   # not a multiple of 128: 2-step grid + ragged (masked) last tile

    key = jax.random.PRNGKey(0)
    kx, kw1, kb1, kw2, kb2 = jax.random.split(key, 5)

    # Deterministic synthetic parameters (torch.nn.Linear-style uniform init).
    bound = 1.0 / jnp.sqrt(hidden_dim)
    x = jax.random.normal(kx, (batch, hidden_dim), dtype=jnp.float32)
    w1 = jax.random.uniform(kw1, (hidden_dim, hidden_dim), jnp.float32, -bound, bound)
    b1 = jax.random.uniform(kb1, (hidden_dim,), jnp.float32, -bound, bound)
    w2 = jax.random.uniform(kw2, (hidden_dim, hidden_dim), jnp.float32, -bound, bound)
    b2 = jax.random.uniform(kb2, (hidden_dim,), jnp.float32, -bound, bound)

    out = two_layer_preact_resnet_linear(x, w1, b1, w2, b2)
    out = jax.block_until_ready(out)
    ref = _reference(x, w1, b1, w2, b2)
    assert out.shape == (batch, hidden_dim)
    assert jnp.allclose(out, ref, atol=1e-4, rtol=1e-4), "mismatch vs reference"

    # Small 3-D input: exercises leading-dim flattening and the tiny-batch path.
    x3 = jax.random.normal(kx, (2, 4, hidden_dim), dtype=jnp.float32)
    out3 = jax.block_until_ready(two_layer_preact_resnet_linear(x3, w1, b1, w2, b2))
    ref3 = _reference(x3, w1, b1, w2, b2)
    assert out3.shape == (2, 4, hidden_dim)
    assert jnp.allclose(out3, ref3, atol=1e-4, rtol=1e-4), "3d mismatch vs reference"

    # TODO(synk): use_layernorm=True branch (pre-activation LayerNorm) is not in
    # the default module config; add an in-kernel layernorm path if needed.
    print("KERNEL_OK")
</pallas_src>

<mosaic_0001>
module attributes {stable_mosaic.version = 11 : i64} {
  func.func @_resnet_block_kernel(%arg0: i32, %arg1: memref<128x32xf32, #tpu.memory_space<vmem>>, %arg2: memref<32x32xf32, #tpu.memory_space<vmem>>, %arg3: memref<32x1xf32, #tpu.memory_space<vmem>>, %arg4: memref<32x32xf32, #tpu.memory_space<vmem>>, %arg5: memref<32x1xf32, #tpu.memory_space<vmem>>, %arg6: memref<128x32xf32, #tpu.memory_space<vmem>>) attributes {dimension_semantics = [#tpu.dimension_semantics<parallel>], iteration_bounds = array<i64: 2>, scalar_prefetch = 0 : i64, scratch_operands = 0 : i64, tpu.core_type = #tpu.core_type<tc>, window_params = [{transform_indices = @transform_0, window_bounds = array<i64: 128, 32>}, {pipeline_mode = #tpu.pipeline_mode<synchronous>, transform_indices = @transform_1, window_bounds = array<i64: 32, 32>}, {pipeline_mode = #tpu.pipeline_mode<synchronous>, transform_indices = @transform_2, window_bounds = array<i64: 32, 1>}, {pipeline_mode = #tpu.pipeline_mode<synchronous>, transform_indices = @transform_3, window_bounds = array<i64: 32, 32>}, {pipeline_mode = #tpu.pipeline_mode<synchronous>, transform_indices = @transform_4, window_bounds = array<i64: 32, 1>}, {transform_indices = @transform_5, window_bounds = array<i64: 128, 32>}]} {
    %c0 = arith.constant 0 : index
    %c0_0 = arith.constant 0 : index
    %0 = vector.load %arg1[%c0, %c0_0] : memref<128x32xf32, #tpu.memory_space<vmem>>, vector<128x32xf32>
    %1 = tpu.transpose %0, [1, 0] : vector<128x32xf32> -> vector<32x128xf32>
    %c0_1 = arith.constant 0 : index
    %c0_2 = arith.constant 0 : index
    %2 = vector.load %arg2[%c0_1, %c0_2] : memref<32x32xf32, #tpu.memory_space<vmem>>, vector<32x32xf32>
    %cst = arith.constant 2.000000e+01 : f32
    %3 = vector.broadcast %cst : f32 to vector<32x128xf32>
    %4 = arith.minimumf %1, %3 : vector<32x128xf32>
    %5 = math.exp %4 : vector<32x128xf32>
    %cst_3 = arith.constant 2.000000e+00 : f32
    %6 = vector.broadcast %cst_3 : f32 to vector<32x128xf32>
    %7 = arith.addf %5, %6 : vector<32x128xf32>
    %8 = arith.mulf %5, %7 : vector<32x128xf32>
    %9 = arith.mulf %1, %8 : vector<32x128xf32>
    %cst_4 = arith.constant 2.000000e+00 : f32
    %10 = vector.broadcast %cst_4 : f32 to vector<32x128xf32>
    %11 = arith.addf %8, %10 : vector<32x128xf32>
    %12 = tpu.reciprocal %11 : vector<32x128xf32> -> vector<32x128xf32>
    %13 = arith.mulf %9, %12 : vector<32x128xf32>
    %cst_5 = arith.constant dense<0.000000e+00> : vector<32x128xf32>
    %14 = tpu.matmul %2, %13, %cst_5 {dimension_numbers = #tpu.dot_dimension_numbers<[1], [0], [0], [1], [0, 0, 1, 1], [], []>} : vector<32x32xf32>, vector<32x128xf32>, vector<32x128xf32> -> vector<32x128xf32>
    %c0_6 = arith.constant 0 : index
    %c0_7 = arith.constant 0 : index
    %15 = vector.load %arg3[%c0_6, %c0_7] : memref<32x1xf32, #tpu.memory_space<vmem>>, vector<32x1xf32>
    %16 = vector.broadcast %15 : vector<32x1xf32> to vector<32x128xf32>
    %17 = arith.addf %14, %16 : vector<32x128xf32>
    %c0_8 = arith.constant 0 : index
    %c0_9 = arith.constant 0 : index
    %18 = vector.load %arg4[%c0_8, %c0_9] : memref<32x32xf32, #tpu.memory_space<vmem>>, vector<32x32xf32>
    %cst_10 = arith.constant 2.000000e+01 : f32
    %19 = vector.broadcast %cst_10 : f32 to vector<32x128xf32>
    %20 = arith.minimumf %17, %19 : vector<32x128xf32>
    %21 = math.exp %20 : vector<32x128xf32>
    %cst_11 = arith.constant 2.000000e+00 : f32
    %22 = vector.broadcast %cst_11 : f32 to vector<32x128xf32>
    %23 = arith.addf %21, %22 : vector<32x128xf32>
    %24 = arith.mulf %21, %23 : vector<32x128xf32>
    %25 = arith.mulf %17, %24 : vector<32x128xf32>
    %cst_12 = arith.constant 2.000000e+00 : f32
    %26 = vector.broadcast %cst_12 : f32 to vector<32x128xf32>
    %27 = arith.addf %24, %26 : vector<32x128xf32>
    %28 = tpu.reciprocal %27 : vector<32x128xf32> -> vector<32x128xf32>
    %29 = arith.mulf %25, %28 : vector<32x128xf32>
    %cst_13 = arith.constant dense<0.000000e+00> : vector<32x128xf32>
    %30 = tpu.matmul %18, %29, %cst_13 {dimension_numbers = #tpu.dot_dimension_numbers<[1], [0], [0], [1], [0, 0, 1, 1], [], []>} : vector<32x32xf32>, vector<32x128xf32>, vector<32x128xf32> -> vector<32x128xf32>
    %c0_14 = arith.constant 0 : index
    %c0_15 = arith.constant 0 : index
    %31 = vector.load %arg5[%c0_14, %c0_15] : memref<32x1xf32, #tpu.memory_space<vmem>>, vector<32x1xf32>
    %32 = vector.broadcast %31 : vector<32x1xf32> to vector<32x128xf32>
    %33 = arith.addf %30, %32 : vector<32x128xf32>
    %34 = tpu.transpose %33, [1, 0] : vector<32x128xf32> -> vector<128x32xf32>
    %35 = arith.addf %34, %0 : vector<128x32xf32>
    %c0_16 = arith.constant 0 : index
    %c0_17 = arith.constant 0 : index
    %36 = vector.load %arg6[%c0_16, %c0_17] : memref<128x32xf32, #tpu.memory_space<vmem>>, vector<128x32xf32>
    tpu.vector_store %arg6[%c0_16, %c0_17], %35 {strides = array<i32>} : memref<128x32xf32, #tpu.memory_space<vmem>>, vector<128x32xf32>,
    return
  }
  func.func @transform_0(%arg0: i32) -> (i32, i32) {
    %c0_i32 = arith.constant 0 : i32
    %c0_i32_0 = arith.constant 0 : i32
    return %arg0, %c0_i32 : i32, i32
  }
  func.func @transform_1(%arg0: i32) -> (i32, i32) {
    %c0_i32 = arith.constant 0 : i32
    %c0_i32_0 = arith.constant 0 : i32
    %c0_i32_1 = arith.constant 0 : i32
    return %c0_i32, %c0_i32_0 : i32, i32
  }
  func.func @transform_2(%arg0: i32) -> (i32, i32) {
    %c0_i32 = arith.constant 0 : i32
    %c0_i32_0 = arith.constant 0 : i32
    %c0_i32_1 = arith.constant 0 : i32
    return %c0_i32, %c0_i32_0 : i32, i32
  }
  func.func @transform_3(%arg0: i32) -> (i32, i32) {
    %c0_i32 = arith.constant 0 : i32
    %c0_i32_0 = arith.constant 0 : i32
    %c0_i32_1 = arith.constant 0 : i32
    return %c0_i32, %c0_i32_0 : i32, i32
  }
  func.func @transform_4(%arg0: i32) -> (i32, i32) {
    %c0_i32 = arith.constant 0 : i32
    %c0_i32_0 = arith.constant 0 : i32
    %c0_i32_1 = arith.constant 0 : i32
    return %c0_i32, %c0_i32_0 : i32, i32
  }
  func.func @transform_5(%arg0: i32) -> (i32, i32) {
    %c0_i32 = arith.constant 0 : i32
    %c0_i32_0 = arith.constant 0 : i32
    return %arg0, %c0_i32 : i32, i32
  }
}

</mosaic_0001>

<llo_original>
// kernel: two_layer_preact_resnet_linear.1
$region0: #{two_layer_preact_resnet_linear.1}
  #allocation0 [shape = 'u32[]', space=smem, size = 0x4, offset = 0x4, fixed_abs, tag = 'smem constant byte address 0x4 - core index']
  #allocation1 [shape = 'u32[144,128]{1,0:T(1,128)}', space=vmem, size = 0x12000, scoped, tag = 'internal scratch']
  %s0 = inlined_call_operand.vmem [shape: f32[200,32], index: 0, kind: input, shape index: {}]
  %s1 = inlined_call_operand.vmem [shape: f32[32,32], index: 1, kind: input, shape index: {}]
  %s2 = inlined_call_operand.vmem [shape: f32[32,1], index: 2, kind: input, shape index: {}]
  %s3 = inlined_call_operand.vmem [shape: f32[32,32], index: 3, kind: input, shape index: {}]
  %s4 = inlined_call_operand.vmem [shape: f32[32,1], index: 4, kind: input, shape index: {}]
  %s5 = inlined_call_operand.vmem [shape: f32[200,32], index: 5, kind: output, shape index: {}]
  %s6 = sld [smem:[#allocation0]]
  $region101: #{two_layer_preact_resnet_linear.1} parent=0
    _
  %s8 = ssub.s32 1, %s6
  %s9 = scalar_select 0, %s8, %s6
  $region1: #{two_layer_preact_resnet_linear.1} parent=0
    #allocation2 [shape = 'u8[131072]{0}', space=vmem, size = 0x20000, scoped, tag = 'output window, operand 0']
    loop: start=0, step=1, limit=4
    $region2: #{two_layer_preact_resnet_linear.1} parent=1 // loop_pre_header
      _
    $region3: #{two_layer_preact_resnet_linear.1} parent=1 // loop_header
      %s11 = sphi 0, %s15
      %p12 = scmp.ge.s32.totalorder %s11, 4
      %s21 = sphi 0, %s23
      %s24 = sphi 0, %s21
      %s25 = sphi 0, %s24
      %s41 = sphi 0, %s25
      %s45 = sphi 0, %s45
      %s47 = sphi 0, %s45
      %s48 = sphi 0, %s47
      %s62 = sphi 0, %s48
      %s66 = sphi 0, %s66
      %s68 = sphi 0, %s66
      %s69 = sphi 0, %s68
      %s83 = sphi 0, %s69
      %s87 = sphi 0, %s87
      %s89 = sphi 0, %s87
      %s90 = sphi 0, %s89
      %s104 = sphi 0, %s90
      %s108 = sphi 0, %s108
      %s110 = sphi 0, %s108
      %s111 = sphi 0, %s110
      %s125 = sphi 0, %s111
      %s131 = sphi 0, %s133
      %s134 = sphi 0, %s131
      %s135 = sphi 0, %s134
      %s151 = sphi 0, %s135
    $region4: #{two_layer_preact_resnet_linear.1} parent=1 // loop_header_branch
      %14 = sbr.rel (%p12) target = $region8
    $region5: #{two_layer_preact_resnet_linear.1} parent=1 // loop_body
      %s16 = ssub.s32 %s11, 1
      %s17 = ssub.s32 %s11, 2
      %s18 = sadd.s32 %s11, 1
      %s19 = ssub.s32 %s11, %s18
      %p20 = scmp.eq.s32.totalorder %s19, 0
      %s22 = sadd.s32 %s21, 1
      %s23 = scalar_select %p20, %s21, %s22
      %p26 = pneg %p20
      %p27 = scmp.eq.s32.totalorder %s11, 1
      %p28 = por %p26, %p27
      %p29 = scmp.ne.s32.totalorder %s21, %s24
      %p30 = scmp.eq.s32.totalorder %s11, 0
      %p31 = por %p29, %p30
      %p32 = scmp.ne.s32.totalorder %s21, %s24
      %p33 = scmp.eq.s32.totalorder %s16, 1
      %p34 = por %p32, %p33
      %p35 = scmp.ne.s32.totalorder %s24, %s25
      %p36 = scmp.eq.s32.totalorder %s16, 0
      %p37 = por %p35, %p36
      %p38 = scmp.ne.s32.totalorder %s24, %s25
      %p39 = scmp.eq.s32.totalorder %s17, 1
      %p40 = por %p38, %p39
      %p42 = scmp.ne.s32.totalorder %s25, %s41
      %p43 = scmp.eq.s32.totalorder %s17, 0
      %p44 = por %p42, %p43
      %s46 = sadd.s32 %s45, 1
      %p49 = scmp.eq.s32.totalorder %s11, 1
      %p50 = scmp.ne.s32.totalorder %s45, %s47
      %p51 = scmp.eq.s32.totalorder %s11, 0
      %p52 = por %p50, %p51
      %p53 = scmp.ne.s32.totalorder %s45, %s47
      %p54 = scmp.eq.s32.totalorder %s16, 1
      %p55 = por %p53, %p54
      %p56 = scmp.ne.s32.totalorder %s47, %s48
      %p57 = scmp.eq.s32.totalorder %s16, 0
      %p58 = por %p56, %p57
      %p59 = scmp.ne.s32.totalorder %s47, %s48
      %p60 = scmp.eq.s32.totalorder %s17, 1
      %p61 = por %p59, %p60
      %p63 = scmp.ne.s32.totalorder %s48, %s62
      %p64 = scmp.eq.s32.totalorder %s17, 0
      %p65 = por %p63, %p64
      %s67 = sadd.s32 %s66, 1
      %p70 = scmp.eq.s32.totalorder %s11, 1
      %p71 = scmp.ne.s32.totalorder %s66, %s68
      %p72 = scmp.eq.s32.totalorder %s11, 0
      %p73 = por %p71, %p72
      %p74 = scmp.ne.s32.totalorder %s66, %s68
      %p75 = scmp.eq.s32.totalorder %s16, 1
      %p76 = por %p74, %p75
      %p77 = scmp.ne.s32.totalorder %s68, %s69
      %p78 = scmp.eq.s32.totalorder %s16, 0
      %p79 = por %p77, %p78
      %p80 = scmp.ne.s32.totalorder %s68, %s69
      %p81 = scmp.eq.s32.totalorder %s17, 1
      %p82 = por %p80, %p81
      %p84 = scmp.ne.s32.totalorder %s69, %s83
      %p85 = scmp.eq.s32.totalorder %s17, 0
      %p86 = por %p84, %p85
      %s88 = sadd.s32 %s87, 1
      %p91 = scmp.eq.s32.totalorder %s11, 1
      %p92 = scmp.ne.s32.totalorder %s87, %s89
      %p93 = scmp.eq.s32.totalorder %s11, 0
      %p94 = por %p92, %p93
      %p95 = scmp.ne.s32.totalorder %s87, %s89
      %p96 = scmp.eq.s32.totalorder %s16, 1
      %p97 = por %p95, %p96
      %p98 = scmp.ne.s32.totalorder %s89, %s90
      %p99 = scmp.eq.s32.totalorder %s16, 0
      %p100 = por %p98, %p99
      %p101 = scmp.ne.s32.totalorder %s89, %s90
      %p102 = scmp.eq.s32.totalorder %s17, 1
      %p103 = por %p101, %p102
      %p105 = scmp.ne.s32.totalorder %s90, %s104
      %p106 = scmp.eq.s32.totalorder %s17, 0
      %p107 = por %p105, %p106
      %s109 = sadd.s32 %s108, 1
      %p112 = scmp.eq.s32.totalorder %s11, 1
      %p113 = scmp.ne.s32.totalorder %s108, %s110
      %p114 = scmp.eq.s32.totalorder %s11, 0
      %p115 = por %p113, %p114
      %p116 = scmp.ne.s32.totalorder %s108, %s110
      %p117 = scmp.eq.s32.totalorder %s16, 1
      %p118 = por %p116, %p117
      %p119 = scmp.ne.s32.totalorder %s110, %s111
      %p120 = scmp.eq.s32.totalorder %s16, 0
      %p121 = por %p119, %p120
      %p122 = scmp.ne.s32.totalorder %s110, %s111
      %p123 = scmp.eq.s32.totalorder %s17, 1
      %p124 = por %p122, %p123
      %p126 = scmp.ne.s32.totalorder %s111, %s125
      %p127 = scmp.eq.s32.totalorder %s17, 0
      %p128 = por %p126, %p127
      %s129 = ssub.s32 %s11, %s18
      %p130 = scmp.eq.s32.totalorder %s129, 0
      %s132 = sadd.s32 %s131, 1
      %s133 = scalar_select %p130, %s131, %s132
      %p136 = pneg %p130
      %p137 = scmp.eq.s32.totalorder %s11, 1
      %p138 = por %p136, %p137
      %p139 = scmp.ne.s32.totalorder %s131, %s134
      %p140 = scmp.eq.s32.totalorder %s11, 0
      %p141 = por %p139, %p140
      %p142 = scmp.ne.s32.totalorder %s131, %s134
      %p143 = scmp.eq.s32.totalorder %s16, 1
      %p144 = por %p142, %p143
      %p145 = scmp.ne.s32.totalorder %s134, %s135
      %p146 = scmp.eq.s32.totalorder %s16, 0
      %p147 = por %p145, %p146
      %p148 = scmp.ne.s32.totalorder %s134, %s135
      %p149 = scmp.eq.s32.totalorder %s17, 1
      %p150 = por %p148, %p149
      %p152 = scmp.ne.s32.totalorder %s135, %s151
      %p153 = scmp.eq.s32.totalorder %s17, 0
      %p154 = por %p152, %p153
      %p155 = scmp.le.s32.totalorder 1, %s11
      %p156 = scmp.lt.s32.totalorder %s11, 3
      %p157 = pnand %p155, %p156
      %p158 = pneg %p157
      // Predicated region
      $region9: #{two_layer_preact_resnet_linear.1} parent=5 // pred_check
        _
      $region10: #{two_layer_preact_resnet_linear.1} parent=5 // pred_check_branch
        %160 = sbr.rel (%p157) target = $region12
      $region11: #{two_layer_preact_resnet_linear.1} parent=5 // pred_region
        %s161 = ssub.s32 %s11, 1
        // Predicated region
        $region13: #{two_layer_preact_resnet_linear.1} parent=11 // pred_check
          %p162 = pneg %p58
        $region14: #{two_layer_preact_resnet_linear.1} parent=11 // pred_check_branch
          %164 = sbr.rel (%p162) target = $region16
        $region15: #{two_layer_preact_resnet_linear.1} parent=11 // pred_region
          _
        $region16: #{two_layer_preact_resnet_linear.1} parent=11 // pred_fallthru
          _
        // Predicated region
        $region17: #{two_layer_preact_resnet_linear.1} parent=11 // pred_check
          %p165 = pneg %p79
        $region18: #{two_layer_preact_resnet_linear.1} parent=11 // pred_check_branch
          %167 = sbr.rel (%p165) target = $region20
        $region19: #{two_layer_preact_resnet_linear.1} parent=11 // pred_region
          _
        $region20: #{two_layer_preact_resnet_linear.1} parent=11 // pred_fallthru
          _
        // Predicated region
        $region21: #{two_layer_preact_resnet_linear.1} parent=11 // pred_check
          %p168 = pneg %p100
        $region22: #{two_layer_preact_resnet_linear.1} parent=11 // pred_check_branch
          %170 = sbr.rel (%p168) target = $region24
        $region23: #{two_layer_preact_resnet_linear.1} parent=11 // pred_region
          _
        $region24: #{two_layer_preact_resnet_linear.1} parent=11 // pred_fallthru
          _
        // Predicated region
        $region25: #{two_layer_preact_resnet_linear.1} parent=11 // pred_check
          %p171 = pneg %p121
        $region26: #{two_layer_preact_resnet_linear.1} parent=11 // pred_check_branch
          %173 = sbr.rel (%p171) target = $region28
        $region27: #{two_layer_preact_resnet_linear.1} parent=11 // pred_region
          _
        $region28: #{two_layer_preact_resnet_linear.1} parent=11 // pred_fallthru
          _
      $region12: #{two_layer_preact_resnet_linear.1} parent=5 // pred_fallthru
        _
      %p174 = scmp.lt.s32.totalorder %s11, 2
      // Predicated region
      $region29: #{two_layer_preact_resnet_linear.1} parent=5 // pred_check
        %p175 = pneg %p174
      $region30: #{two_layer_preact_resnet_linear.1} parent=5 // pred_check_branch
        %177 = sbr.rel (%p175) target = $region32
      $region31: #{two_layer_preact_resnet_linear.1} parent=5 // pred_region
        // Predicated region
        $region33: #{two_layer_preact_resnet_linear.1} parent=31 // pred_check
          %p178 = pneg %p31
        $region34: #{two_layer_preact_resnet_linear.1} parent=31 // pred_check_branch
          %180 = sbr.rel (%p178) target = $region36
        $region35: #{two_layer_preact_resnet_linear.1} parent=31 // pred_region
          %s181 = smul.u32 16, %s11
          %s182 = ssub.s32 25, %s181
          %p183 = scmp.lt.s32.totalorder %s182, 16
          %s184 = scalar_select %p183, %s182, 16
          %s185 = smul.u32 128, %s184
          %p186 = scmp.lt.s32.totalorder %s181, 24
          %s187 = scalar_select %p186, %s181, 24
          %s188 = smul.addr %s187, 8
          %s189 = scalar_lea.vmem %s0, %s188
          %s190 = smul.u32 16, %s11
          %s191 = ssub.s32 25, %s190
          %p192 = scmp.lt.s32.totalorder %s191, 16
          %s193 = scalar_select %p192, %s191, 16
          %s194 = smul.u32 128, %s193
        $region36: #{two_layer_preact_resnet_linear.1} parent=31 // pred_fallthru
          _
      $region32: #{two_layer_preact_resnet_linear.1} parent=5 // pred_fallthru
        _
      %p195 = scmp.le.s32.totalorder 1, %s11
      %p196 = scmp.lt.s32.totalorder %s11, 3
      %p197 = pnand %p195, %p196
      %p198 = pneg %p197
      // Predicated region
      $region37: #{two_layer_preact_resnet_linear.1} parent=5 // pred_check
        _
      $region38: #{two_layer_preact_resnet_linear.1} parent=5 // pred_check_branch
        %200 = sbr.rel (%p197) target = $region40
      $region39: #{two_layer_preact_resnet_linear.1} parent=5 // pred_region
        %s201 = ssub.s32 %s11, 1
        %s202 = smul.u32 16, %s16
        %s203 = ssub.s32 25, %s202
        %p204 = scmp.lt.s32.totalorder %s203, 16
        %s205 = scalar_select %p204, %s203, 16
        %s206 = smul.u32 128, %s205
        %p207 = scmp.lt.s32.totalorder %s202, 24
        %s208 = scalar_select %p207, %s202, 24
        %s209 = smul.addr %s208, 8
        %s210 = scalar_lea.vmem %s0, %s209
        %p211 = pneg %p37
        %p212 = pneg %p34
        %p213 = pneg %p58
        %p214 = pneg %p55
        %p215 = pneg %p79
        %p216 = pneg %p76
        %p217 = pneg %p100
        %p218 = pneg %p97
        %p219 = pneg %p121
        %p220 = pneg %p118
        %p221 = pneg %p147
        %p222 = pneg %p144
        %s223 = sand.u32 %s134, 1
        %s224 = sand.u32 %s134, 1
        %s225 = smul.addr %s224, 128
        %s226 = scalar_lea.vmem [#allocation2], %s225
        %s227 = smul.u32 16, %s16
        %s228 = ssub.s32 25, %s227
        %p229 = scmp.lt.s32.totalorder %s228, 16
        %s230 = scalar_select %p229, %s228, 16
        %s231 = smul.u32 128, %s230
        %p232 = scmp.lt.s32.totalorder %s227, 24
        %s233 = scalar_select %p232, %s227, 24
        %s234 = smul.addr %s233, 8
        %s235 = scalar_lea.vmem %s0, %s234
        %s236 = smul.u32 16, %s16
        %s237 = ssub.s32 25, %s236
        %p238 = scmp.lt.s32.totalorder %s237, 16
        %s239 = scalar_select %p238, %s237, 16
        %s240 = smul.u32 128, %s239
        %s241 = smul.u32 16, %s16
        %s242 = ssub.s32 25, %s241
        %p243 = scmp.lt.s32.totalorder %s242, 16
        %s244 = scalar_select %p243, %s242, 16
        %s245 = smul.u32 128, %s244
        %v246 = vld [vmem:[%s235] sm:$0xff]
        %v247 = vld [vmem:[%s235 + $0x8] sm:$0xff]
        %v248 = vld [vmem:[%s235 + $0x10] sm:$0xff]
        %v249 = vld [vmem:[%s235 + $0x18] sm:$0xff]
        %v250 = vld [vmem:[%s235 + $0x20] sm:$0xff]
        %v251 = vld [vmem:[%s235 + $0x28] sm:$0xff]
        %v252 = vld [vmem:[%s235 + $0x30] sm:$0xff]
        %v253 = vld [vmem:[%s235 + $0x38] sm:$0xff]
        %v254 = vld [vmem:[%s235 + $0x40] sm:$0xff]
        %v255 = vld [vmem:[%s235 + $0x48] sm:$0xff]
        %v256 = vld [vmem:[%s235 + $0x50] sm:$0xff]
        %v257 = vld [vmem:[%s235 + $0x58] sm:$0xff]
        %v258 = vld [vmem:[%s235 + $0x60] sm:$0xff]
        %v259 = vld [vmem:[%s235 + $0x68] sm:$0xff]
        %v260 = vld [vmem:[%s235 + $0x70] sm:$0xff]
        %v261 = vld [vmem:[%s235 + $0x78] sm:$0xff]
        %262 = vxpose.xlu0.b32.start [1/16] %v246, 128
        %263 = vxpose.xlu0.b32.cont [2/16] %v247, 128
        %264 = vxpose.xlu0.b32.cont [3/16] %v248, 128
        %265 = vxpose.xlu0.b32.cont [4/16] %v249, 128
        %266 = vxpose.xlu0.b32.cont [5/16] %v250, 128
        %267 = vxpose.xlu0.b32.cont [6/16] %v251, 128
        %268 = vxpose.xlu0.b32.cont [7/16] %v252, 128
        %269 = vxpose.xlu0.b32.cont [8/16] %v253, 128
        %270 = vxpose.xlu0.b32.cont [9/16] %v254, 128
        %271 = vxpose.xlu0.b32.cont [10/16] %v255, 128
        %272 = vxpose.xlu0.b32.cont [11/16] %v256, 128
        %273 = vxpose.xlu0.b32.cont [12/16] %v257, 128
        %274 = vxpose.xlu0.b32.cont [13/16] %v258, 128
        %275 = vxpose.xlu0.b32.cont [14/16] %v259, 128
        %276 = vxpose.xlu0.b32.cont [15/16] %v260, 128
        %277 = vxpose.xlu0.b32.end [16/16] %v261, 128
        %v278 = vpop.trf.xlu0
        %v279 = vpop.trf.xlu0
        %v280 = vpop.trf.xlu0
        %v281 = vpop.trf.xlu0
        %v282 = vpop.trf.xlu0
        %v283 = vpop.trf.xlu0
        %v284 = vpop.trf.xlu0
        %v285 = vpop.trf.xlu0
        %v286 = vpop.trf.xlu0
        %v287 = vpop.trf.xlu0
        %v288 = vpop.trf.xlu0
        %v289 = vpop.trf.xlu0
        %v290 = vpop.trf.xlu0
        %v291 = vpop.trf.xlu0
        %v292 = vpop.trf.xlu0
        %v293 = vpop.trf.xlu0
        %v294 = vld [vmem:[%s1] sm:$0xff]
        %v295 = vld [vmem:[%s1 + $0x8] sm:$0xff]
        %v296 = vld [vmem:[%s1 + $0x10] sm:$0xff]
        %v297 = vld [vmem:[%s1 + $0x18] sm:$0xff]
        %v298 = vmin.f32 %v278, 20.0
        %v299 = vmin.f32 %v279, 20.0
        %v300 = vmin.f32 %v280, 20.0
        %v301 = vmin.f32 %v281, 20.0
        %v302 = vmul.f32 %v298, 1.442695
        %v303 = vpow.pop %v302
        %v304 = vmul.f32 %v299, 1.442695
        %v305 = vpow.pop %v304
        %v306 = vmul.f32 %v300, 1.442695
        %v307 = vpow.pop %v306
        %v308 = vmul.f32 %v301, 1.442695
        %v309 = vpow.pop %v308
        %v310 = vadd.f32 %v303, 2.0
        %v311 = vadd.f32 %v305, 2.0
        %v312 = vadd.f32 %v307, 2.0
        %v313 = vadd.f32 %v309, 2.0
        %v314 = vmul.f32 %v303, %v310
        %v315 = vmul.f32 %v305, %v311
        %v316 = vmul.f32 %v307, %v312
        %v317 = vmul.f32 %v309, %v313
        %v318 = vmul.f32 %v278, %v314
        %v319 = vmul.f32 %v279, %v315
        %v320 = vmul.f32 %v280, %v316
        %v321 = vmul.f32 %v281, %v317
        %v322 = vadd.f32 %v314, 2.0
        %v323 = vadd.f32 %v315, 2.0
        %v324 = vadd.f32 %v316, 2.0
        %v325 = vadd.f32 %v317, 2.0
        %v326 = vrcp.pop %v322
        %v327 = vrcp.pop %v323
        %v328 = vrcp.pop %v324
        %v329 = vrcp.pop %v325
        %v330 = vmul.f32 %v318, %v326
        %v331 = vmul.f32 %v319, %v327
        %v332 = vmul.f32 %v320, %v328
        %v333 = vmul.f32 %v321, %v329
        %v334 = vld [vmem:[%s2] sm:$0xff]
        %v335 = vld [vmem:[%s2 + $0x8] sm:$0xff]
        %v336 = vld [vmem:[%s2 + $0x10] sm:$0xff]
        %v337 = vld [vmem:[%s2 + $0x18] sm:$0xff]
        %339 = vset.pattern.permute.xlu0 0
        %340 = vperm.xlu0 %339, %v334
        %v341 = vpop.permute.xlu0 %340
        %344 = vset.pattern.permute.xlu0 0
        %345 = vperm.xlu0 %344, %v335
        %v346 = vpop.permute.xlu0 %345
        %349 = vset.pattern.permute.xlu0 0
        %350 = vperm.xlu0 %349, %v336
        %v351 = vpop.permute.xlu0 %350
        %354 = vset.pattern.permute.xlu0 0
        %355 = vperm.xlu0 %354, %v337
        %v356 = vpop.permute.xlu0 %355
        %vm358 = vcmask 261120
        %v360 = vsel %vm358, %v294, 0
        %v363 = vsel %vm358, %v295, 0
        %v366 = vsel %vm358, %v296, 0
        %v369 = vsel %vm358, %v297, 0
        %371 = vmatprep.subr.mxu0 0.0
        %372 = vmatpush1.msra.mxu0 %v330
        %373 = vmatprep.subr.mxu0 0.0
        %374 = vmatpush1.msra.mxu0 %v331
        %375 = vmatprep.subr.mxu0 0.0
        %376 = vmatpush1.msra.mxu0 %v332
        %377 = vmatprep.subr.mxu0 0.0
        %378 = vmatpush1.msra.mxu0 %v333
        %379 = vmatprep.subr.mxu0 0.0
        %380 = vmatpush1.msra.mxu0 0.0
        %381 = vmatprep.subr.mxu0 0.0
        %382 = vmatpush1.msra.mxu0 0.0
        %383 = vmatprep.subr.mxu0 0.0
        %384 = vmatpush1.msra.mxu0 0.0
        %385 = vmatprep.subr.mxu0 0.0
        %386 = vmatpush1.msra.mxu0 0.0
        %387 = vmatprep.subr.mxu0 0.0
        %388 = vmatpush1.msra.mxu0 0.0
        %389 = vmatprep.subr.mxu0 0.0
        %390 = vmatpush1.msra.mxu0 0.0
        %391 = vmatprep.subr.mxu0 0.0
        %392 = vmatpush1.msra.mxu0 0.0
        %393 = vmatprep.subr.mxu0 0.0
        %394 = vmatpush1.msra.mxu0 0.0
        %395 = vmatprep.subr.mxu0 0.0
        %396 = vmatpush1.msra.mxu0 0.0
        %397 = vmatprep.subr.mxu0 0.0
        %398 = vmatpush1.msra.mxu0 0.0
        %399 = vmatprep.subr.mxu0 0.0
        %400 = vmatpush1.msra.mxu0 0.0
        %401 = vmatprep.subr.mxu0 0.0
        %402 = vmatpush1.msra.mxu0 0.0
        %403 = vmatprep.subr.mxu0 0.0
        %404 = vmatpush1.msra.mxu0 0.0
        %405 = vmatprep.subr.mxu0 0.0
        %406 = vmatpush1.msra.mxu0 0.0
        %407 = vmatprep.subr.mxu0 0.0
        %408 = vmatpush1.msra.mxu0 0.0
        %409 = vmatprep.subr.mxu0 0.0
        %410 = vmatpush1.msra.mxu0 0.0
        %411 = vmatprep.subr.mxu0 0.0
        %412 = vmatpush1.msra.mxu0 0.0
        %413 = vmatprep.subr.mxu0 0.0
        %414 = vmatpush1.msra.mxu0 0.0
        %415 = vmatprep.subr.mxu0 0.0
        %416 = vmatpush1.msra.mxu0 0.0
        %417 = vmatprep.subr.mxu0 0.0
        %418 = vmatpush1.msra.mxu0 0.0
        %419 = vmatprep.subr.mxu0 0.0
        %420 = vmatpush1.msra.mxu0 0.0
        %421 = vmatprep.subr.mxu0 0.0
        %422 = vmatpush1.msra.mxu0 0.0
        %423 = vmatprep.subr.mxu0 0.0
        %424 = vmatpush1.msra.mxu0 0.0
        %425 = vmatprep.subr.mxu0 0.0
        %426 = vmatpush1.msra.mxu0 0.0
        %427 = vmatprep.subr.mxu0 0.0
        %428 = vmatpush1.msra.mxu0 0.0
        %429 = vmatprep.subr.mxu0 0.0
        %430 = vmatpush1.msra.mxu0 0.0
        %431 = vmatprep.subr.mxu0 0.0
        %432 = vmatpush1.msra.mxu0 0.0
        %433 = vmatprep.subr.mxu0 0.0
        %434 = vmatpush1.msra.mxu0 0.0
        %435 = vmatprep.mubr.f32.mxu0 0.0
        %436 = vmatmul.mubr.f32.gmra.mrb[0].mxu0 %v360
        %v437 = vpop.f32.mrb[0].mxu0
        %v438 = vadd.f32 %v341, %v437
        %v439 = vpop.f32.mrb[0].mxu0
        %440 = vmatprep.mubr.f32.mxu0 0.0
        %441 = vmatmul.mubr.f32.gmra.mrb[0].mxu0 %v363
        %v442 = vpop.f32.mrb[0].mxu0
        %v443 = vadd.f32 %v346, %v442
        %v444 = vpop.f32.mrb[0].mxu0
        %445 = vmatprep.mubr.f32.mxu0 0.0
        %446 = vmatmul.mubr.f32.gmra.mrb[0].mxu0 %v366
        %v447 = vpop.f32.mrb[0].mxu0
        %v448 = vadd.f32 %v351, %v447
        %v449 = vpop.f32.mrb[0].mxu0
        %450 = vmatprep.mubr.f32.mxu0 0.0
        %451 = vmatmul.mubr.f32.gmra.mrb[0].mxu0 %v369
        %v452 = vpop.f32.mrb[0].mxu0
        %v453 = vadd.f32 %v356, %v452
        %v454 = vpop.f32.mrb[0].mxu0
        %455 = vdwg.mxu0
        %v456 = vld [vmem:[%s3] sm:$0xff]
        %v457 = vld [vmem:[%s3 + $0x8] sm:$0xff]
        %v458 = vld [vmem:[%s3 + $0x10] sm:$0xff]
        %v459 = vld [vmem:[%s3 + $0x18] sm:$0xff]
        %v460 = vmin.f32 %v438, 20.0
        %v461 = vmin.f32 %v443, 20.0
        %v462 = vmin.f32 %v448, 20.0
        %v463 = vmin.f32 %v453, 20.0
        %v464 = vmul.f32 %v460, 1.442695
        %v465 = vpow.pop %v464
        %v466 = vmul.f32 %v461, 1.442695
        %v467 = vpow.pop %v466
        %v468 = vmul.f32 %v462, 1.442695
        %v469 = vpow.pop %v468
        %v470 = vmul.f32 %v463, 1.442695
        %v471 = vpow.pop %v470
        %v472 = vadd.f32 %v465, 2.0
        %v473 = vadd.f32 %v467, 2.0
        %v474 = vadd.f32 %v469, 2.0
        %v475 = vadd.f32 %v471, 2.0
        %v476 = vmul.f32 %v465, %v472
        %v477 = vmul.f32 %v467, %v473
        %v478 = vmul.f32 %v469, %v474
        %v479 = vmul.f32 %v471, %v475
        %v480 = vmul.f32 %v438, %v476
        %v481 = vmul.f32 %v443, %v477
        %v482 = vmul.f32 %v448, %v478
        %v483 = vmul.f32 %v453, %v479
        %v484 = vadd.f32 %v476, 2.0
        %v485 = vadd.f32 %v477, 2.0
        %v486 = vadd.f32 %v478, 2.0
        %v487 = vadd.f32 %v479, 2.0
        %v488 = vrcp.pop %v484
        %v489 = vrcp.pop %v485
        %v490 = vrcp.pop %v486
        %v491 = vrcp.pop %v487
        %v492 = vmul.f32 %v480, %v488
        %v493 = vmul.f32 %v481, %v489
        %v494 = vmul.f32 %v482, %v490
        %v495 = vmul.f32 %v483, %v491
        %v496 = vld [vmem:[%s4] sm:$0xff]
        %v497 = vld [vmem:[%s4 + $0x8] sm:$0xff]
        %v498 = vld [vmem:[%s4 + $0x10] sm:$0xff]
        %v499 = vld [vmem:[%s4 + $0x18] sm:$0xff]
        %501 = vset.pattern.permute.xlu0 0
        %502 = vperm.xlu0 %501, %v496
        %v503 = vpop.permute.xlu0 %502
        %506 = vset.pattern.permute.xlu0 0
        %507 = vperm.xlu0 %506, %v497
        %v508 = vpop.permute.xlu0 %507
        %511 = vset.pattern.permute.xlu0 0
        %512 = vperm.xlu0 %511, %v498
        %v513 = vpop.permute.xlu0 %512
        %516 = vset.pattern.permute.xlu0 0
        %517 = vperm.xlu0 %516, %v499
        %v518 = vpop.permute.xlu0 %517
        %v521 = vsel %vm358, %v456, 0
        %v524 = vsel %vm358, %v457, 0
        %v527 = vsel %vm358, %v458, 0
        %v530 = vsel %vm358, %v459, 0
        %532 = vmatprep.subr.mxu0 0.0
        %533 = vmatpush1.msra.mxu0 %v492
        %534 = vmatprep.subr.mxu0 0.0
        %535 = vmatpush1.msra.mxu0 %v493
        %536 = vmatprep.subr.mxu0 0.0
        %537 = vmatpush1.msra.mxu0 %v494
        %538 = vmatprep.subr.mxu0 0.0
        %539 = vmatpush1.msra.mxu0 %v495
        %540 = vmatprep.subr.mxu0 0.0
        %541 = vmatpush1.msra.mxu0 0.0
        %542 = vmatprep.subr.mxu0 0.0
        %543 = vmatpush1.msra.mxu0 0.0
        %544 = vmatprep.subr.mxu0 0.0
        %545 = vmatpush1.msra.mxu0 0.0
        %546 = vmatprep.subr.mxu0 0.0
        %547 = vmatpush1.msra.mxu0 0.0
        %548 = vmatprep.subr.mxu0 0.0
        %549 = vmatpush1.msra.mxu0 0.0
        %550 = vmatprep.subr.mxu0 0.0
        %551 = vmatpush1.msra.mxu0 0.0
        %552 = vmatprep.subr.mxu0 0.0
        %553 = vmatpush1.msra.mxu0 0.0
        %554 = vmatprep.subr.mxu0 0.0
        %555 = vmatpush1.msra.mxu0 0.0
        %556 = vmatprep.subr.mxu0 0.0
        %557 = vmatpush1.msra.mxu0 0.0
        %558 = vmatprep.subr.mxu0 0.0
        %559 = vmatpush1.msra.mxu0 0.0
        %560 = vmatprep.subr.mxu0 0.0
        %561 = vmatpush1.msra.mxu0 0.0
        %562 = vmatprep.subr.mxu0 0.0
        %563 = vmatpush1.msra.mxu0 0.0
        %564 = vmatprep.subr.mxu0 0.0
        %565 = vmatpush1.msra.mxu0 0.0
        %566 = vmatprep.subr.mxu0 0.0
        %567 = vmatpush1.msra.mxu0 0.0
        %568 = vmatprep.subr.mxu0 0.0
        %569 = vmatpush1.msra.mxu0 0.0
        %570 = vmatprep.subr.mxu0 0.0
        %571 = vmatpush1.msra.mxu0 0.0
        %572 = vmatprep.subr.mxu0 0.0
        %573 = vmatpush1.msra.mxu0 0.0
        %574 = vmatprep.subr.mxu0 0.0
        %575 = vmatpush1.msra.mxu0 0.0
        %576 = vmatprep.subr.mxu0 0.0
        %577 = vmatpush1.msra.mxu0 0.0
        %578 = vmatprep.subr.mxu0 0.0
        %579 = vmatpush1.msra.mxu0 0.0
        %580 = vmatprep.subr.mxu0 0.0
        %581 = vmatpush1.msra.mxu0 0.0
        %582 = vmatprep.subr.mxu0 0.0
        %583 = vmatpush1.msra.mxu0 0.0
        %584 = vmatprep.subr.mxu0 0.0
        %585 = vmatpush1.msra.mxu0 0.0
        %586 = vmatprep.subr.mxu0 0.0
        %587 = vmatpush1.msra.mxu0 0.0
        %588 = vmatprep.subr.mxu0 0.0
        %589 = vmatpush1.msra.mxu0 0.0
        %590 = vmatprep.subr.mxu0 0.0
        %591 = vmatpush1.msra.mxu0 0.0
        %592 = vmatprep.subr.mxu0 0.0
        %593 = vmatpush1.msra.mxu0 0.0
        %594 = vmatprep.subr.mxu0 0.0
        %595 = vmatpush1.msra.mxu0 0.0
        %596 = vmatprep.mubr.f32.mxu0 0.0
        %597 = vmatmul.mubr.f32.gmra.mrb[0].mxu0 %v521
        %v598 = vpop.f32.mrb[0].mxu0
        %v599 = vadd.f32 %v503, %v598
        %v600 = vpop.f32.mrb[0].mxu0
        %601 = vmatprep.mubr.f32.mxu0 0.0
        %602 = vmatmul.mubr.f32.gmra.mrb[0].mxu0 %v524
        %v603 = vpop.f32.mrb[0].mxu0
        %v604 = vadd.f32 %v508, %v603
        %v605 = vpop.f32.mrb[0].mxu0
        %606 = vmatprep.mubr.f32.mxu0 0.0
        %607 = vmatmul.mubr.f32.gmra.mrb[0].mxu0 %v527
        %v608 = vpop.f32.mrb[0].mxu0
        %v609 = vadd.f32 %v513, %v608
        %v610 = vpop.f32.mrb[0].mxu0
        %611 = vmatprep.mubr.f32.mxu0 0.0
        %612 = vmatmul.mubr.f32.gmra.mrb[0].mxu0 %v530
        %v613 = vpop.f32.mrb[0].mxu0
        %v614 = vadd.f32 %v518, %v613
        %v615 = vpop.f32.mrb[0].mxu0
        %616 = vdwg.mxu0
        %617 = vxpose.xlu0.b32.start [1/16] %v599, 128
        %618 = vxpose.xlu0.b32.cont [2/16] %v604, 128
        %619 = vxpose.xlu0.b32.cont [3/16] %v609, 128
        %620 = vxpose.xlu0.b32.cont [4/16] %v614, 128
        %621 = vxpose.xlu0.b32.cont [5/16] 0.0, 128
        %622 = vxpose.xlu0.b32.cont [6/16] 0.0, 128
        %623 = vxpose.xlu0.b32.cont [7/16] 0.0, 128
        %624 = vxpose.xlu0.b32.cont [8/16] 0.0, 128
        %625 = vxpose.xlu0.b32.cont [9/16] 0.0, 128
        %626 = vxpose.xlu0.b32.cont [10/16] 0.0, 128
        %627 = vxpose.xlu0.b32.cont [11/16] 0.0, 128
        %628 = vxpose.xlu0.b32.cont [12/16] 0.0, 128
        %629 = vxpose.xlu0.b32.cont [13/16] 0.0, 128
        %630 = vxpose.xlu0.b32.cont [14/16] 0.0, 128
        %631 = vxpose.xlu0.b32.cont [15/16] 0.0, 128
        %632 = vxpose.xlu0.b32.end [16/16] 0.0, 128
        %v633 = vpop.trf.xlu0
        %v634 = vpop.trf.xlu0
        %v635 = vpop.trf.xlu0
        %v636 = vpop.trf.xlu0
        %v637 = vpop.trf.xlu0
        %v638 = vpop.trf.xlu0
        %v639 = vpop.trf.xlu0
        %v640 = vpop.trf.xlu0
        %v641 = vpop.trf.xlu0
        %v642 = vpop.trf.xlu0
        %v643 = vpop.trf.xlu0
        %v644 = vpop.trf.xlu0
        %v645 = vpop.trf.xlu0
        %v646 = vpop.trf.xlu0
        %v647 = vpop.trf.xlu0
        %v648 = vpop.trf.xlu0
        %v649 = vadd.f32 %v633, %v246
        %v650 = vadd.f32 %v634, %v247
        %v651 = vadd.f32 %v635, %v248
        %v652 = vadd.f32 %v636, %v249
        %v653 = vadd.f32 %v637, %v250
        %v654 = vadd.f32 %v638, %v251
        %v655 = vadd.f32 %v639, %v252
        %v656 = vadd.f32 %v640, %v253
        %v657 = vadd.f32 %v641, %v254
        %v658 = vadd.f32 %v642, %v255
        %v659 = vadd.f32 %v643, %v256
        %v660 = vadd.f32 %v644, %v257
        %v661 = vadd.f32 %v645, %v258
        %v662 = vadd.f32 %v646, %v259
        %v663 = vadd.f32 %v647, %v260
        %v664 = vadd.f32 %v648, %v261
        %665 = vst.msk [vmem:[%s226] sm:$0xff] %vm358, %v649
        %666 = vst.msk [vmem:[%s226 + $0x8] sm:$0xff] %vm358, %v650
        %667 = vst.msk [vmem:[%s226 + $0x10] sm:$0xff] %vm358, %v651
        %668 = vst.msk [vmem:[%s226 + $0x18] sm:$0xff] %vm358, %v652
        %669 = vst.msk [vmem:[%s226 + $0x20] sm:$0xff] %vm358, %v653
        %670 = vst.msk [vmem:[%s226 + $0x28] sm:$0xff] %vm358, %v654
        %671 = vst.msk [vmem:[%s226 + $0x30] sm:$0xff] %vm358, %v655
        %672 = vst.msk [vmem:[%s226 + $0x38] sm:$0xff] %vm358, %v656
        %673 = vst.msk [vmem:[%s226 + $0x40] sm:$0xff] %vm358, %v657
        %674 = vst.msk [vmem:[%s226 + $0x48] sm:$0xff] %vm358, %v658
        %675 = vst.msk [vmem:[%s226 + $0x50] sm:$0xff] %vm358, %v659
        %676 = vst.msk [vmem:[%s226 + $0x58] sm:$0xff] %vm358, %v660
        %677 = vst.msk [vmem:[%s226 + $0x60] sm:$0xff] %vm358, %v661
        %678 = vst.msk [vmem:[%s226 + $0x68] sm:$0xff] %vm358, %v662
        %679 = vst.msk [vmem:[%s226 + $0x70] sm:$0xff] %vm358, %v663
        %680 = vst.msk [vmem:[%s226 + $0x78] sm:$0xff] %vm358, %v664
        %s681 = sand.u32 %s134, 1
        %s682 = sand.u32 %s134, 1
        %s683 = smul.addr %s682, 128
        %s684 = scalar_lea.vmem [#allocation2], %s683
        // Predicated region
        $region41: #{two_layer_preact_resnet_linear.1} parent=39 // pred_check
          %p685 = pneg %p144
        $region42: #{two_layer_preact_resnet_linear.1} parent=39 // pred_check_branch
          %687 = sbr.rel (%p685) target = $region44
        $region43: #{two_layer_preact_resnet_linear.1} parent=39 // pred_region
          %s688 = smul.u32 16, %s16
          %s689 = ssub.s32 25, %s688
          %p690 = scmp.lt.s32.totalorder %s689, 16
          %s691 = scalar_select %p690, %s689, 16
          %s692 = smul.u32 128, %s691
          %p693 = scmp.ne.s32.totalorder 0, %s692
          %s694 = smul.addr %s688, 8
          %s695 = scalar_lea.vmem %s5, %s694
          // Predicated region
          $region45: #{two_layer_preact_resnet_linear.1} parent=43 // pred_check
            %p696 = pneg %p693
          $region46: #{two_layer_preact_resnet_linear.1} parent=43 // pred_check_branch
            %698 = sbr.rel (%p696) target = $region48
          $region47: #{two_layer_preact_resnet_linear.1} parent=43 // pred_region
            // Predicated region
            $region49: #{two_layer_preact_resnet_linear.1} parent=47 // pred_check
              _
            $region50: #{two_layer_preact_resnet_linear.1} parent=47 // pred_check_branch
              %700 = sbr.rel (0) target = $region52
            $region51: #{two_layer_preact_resnet_linear.1} parent=47 // pred_region
              // Predicated region
              $region71: #{two_layer_preact_resnet_linear.1} parent=51 // pred_check
                _
              $region72: #{two_layer_preact_resnet_linear.1} parent=51 // pred_check_branch
                %779 = sbr.rel (0) target = $region74
              $region73: #{two_layer_preact_resnet_linear.1} parent=51 // pred_region
                %s780 = sshrl.u32 %s691, 4
                // While loop
                $region75: #{two_layer_preact_resnet_linear.1} parent=73 // loop_pre_header
                  _
                $region76: #{two_layer_preact_resnet_linear.1} parent=73 // loop_header
                  %s782 = sphi 0, %s784
                  %p783 = scmp.ge.s32.totalorder %s782, %s780
                  %s787 = sphi 0, %s824
                  %s788 = sphi %s684, %s827
                  %s789 = sphi %s695, %s828
                $region77: #{two_layer_preact_resnet_linear.1} parent=73 // loop_header_branch
                  %786 = sbr.rel (%p783) target = $region81
                $region78: #{two_layer_preact_resnet_linear.1} parent=73 // loop_body
                  %v790 = vld [vmem:[%s788] sm:$0xff]
                  %791 = vst [vmem:[%s789] sm:$0xff] %v790
                  %v792 = vld [vmem:[%s788 + $0x8] sm:$0xff]
                  %793 = vst [vmem:[%s789 + $0x8] sm:$0xff] %v792
                  %v794 = vld [vmem:[%s788 + $0x10] sm:$0xff]
                  %795 = vst [vmem:[%s789 + $0x10] sm:$0xff] %v794
                  %v796 = vld [vmem:[%s788 + $0x18] sm:$0xff]
                  %797 = vst [vmem:[%s789 + $0x18] sm:$0xff] %v796
                  %v798 = vld [vmem:[%s788 + $0x20] sm:$0xff]
                  %799 = vst [vmem:[%s789 + $0x20] sm:$0xff] %v798
                  %v800 = vld [vmem:[%s788 + $0x28] sm:$0xff]
                  %801 = vst [vmem:[%s789 + $0x28] sm:$0xff] %v800
                  %v802 = vld [vmem:[%s788 + $0x30] sm:$0xff]
                  %803 = vst [vmem:[%s789 + $0x30] sm:$0xff] %v802
                  %v804 = vld [vmem:[%s788 + $0x38] sm:$0xff]
                  %805 = vst [vmem:[%s789 + $0x38] sm:$0xff] %v804
                  %v806 = vld [vmem:[%s788 + $0x40] sm:$0xff]
                  %807 = vst [vmem:[%s789 + $0x40] sm:$0xff] %v806
                  %v808 = vld [vmem:[%s788 + $0x48] sm:$0xff]
                  %809 = vst [vmem:[%s789 + $0x48] sm:$0xff] %v808
                  %v810 = vld [vmem:[%s788 + $0x50] sm:$0xff]
                  %811 = vst [vmem:[%s789 + $0x50] sm:$0xff] %v810
                  %v812 = vld [vmem:[%s788 + $0x58] sm:$0xff]
                  %813 = vst [vmem:[%s789 + $0x58] sm:$0xff] %v812
                  %v814 = vld [vmem:[%s788 + $0x60] sm:$0xff]
                  %815 = vst [vmem:[%s789 + $0x60] sm:$0xff] %v814
                  %v816 = vld [vmem:[%s788 + $0x68] sm:$0xff]
                  %817 = vst [vmem:[%s789 + $0x68] sm:$0xff] %v816
                  %v818 = vld [vmem:[%s788 + $0x70] sm:$0xff]
                  %819 = vst [vmem:[%s789 + $0x70] sm:$0xff] %v818
                  %v820 = vld [vmem:[%s788 + $0x78] sm:$0xff]
                  %821 = vst [vmem:[%s789 + $0x78] sm:$0xff] %v820
                  %s822 = sadd.s32 1, %s787
                  %p823 = scmp.ge.s32.totalorder %s822, %s780
                  %s824 = scalar_select %p823, 0, %s822
                  %s825 = smul.u32 %s824, 128
                  %s826 = smul.u32 %s824, 128
                  %s827 = scalar_lea.vmem %s684, %s825 [#allocation2]
                  %s828 = scalar_lea.vmem %s695, %s826
                $region79: #{two_layer_preact_resnet_linear.1} parent=73 // loop_footer
                  %s784 = sadd.s32 %s782, 1
                $region80: #{two_layer_preact_resnet_linear.1} parent=73 // loop_footer_branch
                  %781 = sbr.rel target = $region76
                $region81: #{two_layer_preact_resnet_linear.1} parent=73 // loop_exit
                  _
                %s829 = sshrl.u32 %s691, 4
                %s830 = sand.u32 %s691, 15
                %s831 = smul.u32 %s829, 16
                %s832 = smul.u32 8, %s831
                %s833 = scalar_lea.vmem %s684, %s832 [#allocation2]
                %s834 = smul.u32 8, %s831
                %s835 = scalar_lea.vmem %s695, %s834
                // While loop
                $region82: #{two_layer_preact_resnet_linear.1} parent=73 // loop_pre_header
                  _
                $region83: #{two_layer_preact_resnet_linear.1} parent=73 // loop_header
                  %s837 = sphi 0, %s839
                  %p838 = scmp.ge.s32.totalorder %s837, %s830
                  %s842 = sphi 0, %s849
                  %s843 = sphi %s833, %s852
                  %s844 = sphi %s835, %s853
                $region84: #{two_layer_preact_resnet_linear.1} parent=73 // loop_header_branch
                  %841 = sbr.rel (%p838) target = $region88
                $region85: #{two_layer_preact_resnet_linear.1} parent=73 // loop_body
                  %v845 = vld [vmem:[%s843] sm:$0xff]
                  %846 = vst [vmem:[%s844] sm:$0xff] %v845
                  %s847 = sadd.s32 1, %s842
                  %p848 = scmp.ge.s32.totalorder %s847, %s830
                  %s849 = scalar_select %p848, 0, %s847
                  %s850 = smul.u32 %s849, 8
                  %s851 = smul.u32 %s849, 8
                  %s852 = scalar_lea.vmem %s833, %s850 [#allocation2]
                  %s853 = scalar_lea.vmem %s835, %s851
                $region86: #{two_layer_preact_resnet_linear.1} parent=73 // loop_footer
                  %s839 = sadd.s32 %s837, 1
                $region87: #{two_layer_preact_resnet_linear.1} parent=73 // loop_footer_branch
                  %836 = sbr.rel target = $region83
                $region88: #{two_layer_preact_resnet_linear.1} parent=73 // loop_exit
                  _
              $region74: #{two_layer_preact_resnet_linear.1} parent=51 // pred_fallthru
                _
              // Predicated region
              $region89: #{two_layer_preact_resnet_linear.1} parent=51 // pred_check
                _
              $region90: #{two_layer_preact_resnet_linear.1} parent=51 // pred_check_branch
                %855 = sbr.rel target = $region92
              $region91: #{two_layer_preact_resnet_linear.1} parent=51 // pred_region
                _
              $region92: #{two_layer_preact_resnet_linear.1} parent=51 // pred_fallthru
                _
            $region52: #{two_layer_preact_resnet_linear.1} parent=47 // pred_fallthru
              _
            // Predicated region
            $region53: #{two_layer_preact_resnet_linear.1} parent=47 // pred_check
              _
            $region54: #{two_layer_preact_resnet_linear.1} parent=47 // pred_check_branch
              %702 = sbr.rel target = $region56
            $region55: #{two_layer_preact_resnet_linear.1} parent=47 // pred_region
              %s704 = sshrl.u32 %s691, 4
              // While loop
              $region57: #{two_layer_preact_resnet_linear.1} parent=55 // loop_pre_header
                _
              $region58: #{two_layer_preact_resnet_linear.1} parent=55 // loop_header
                %s706 = sphi 0, %s708
                %p707 = scmp.ge.s32.totalorder %s706, %s704
                %s711 = sphi 0, %s748
                %s712 = sphi %s684, %s751
                %s713 = sphi %s695, %s752
              $region59: #{two_layer_preact_resnet_linear.1} parent=55 // loop_header_branch
                %710 = sbr.rel (%p707) target = $region63
              $region60: #{two_layer_preact_resnet_linear.1} parent=55 // loop_body
                %v714 = vld [vmem:[%s712] sm:$0xff]
                %715 = vst [vmem:[%s713] sm:$0xff] %v714
                %v716 = vld [vmem:[%s712 + $0x8] sm:$0xff]
                %717 = vst [vmem:[%s713 + $0x8] sm:$0xff] %v716
                %v718 = vld [vmem:[%s712 + $0x10] sm:$0xff]
                %719 = vst [vmem:[%s713 + $0x10] sm:$0xff] %v718
                %v720 = vld [vmem:[%s712 + $0x18] sm:$0xff]
                %721 = vst [vmem:[%s713 + $0x18] sm:$0xff] %v720
                %v722 = vld [vmem:[%s712 + $0x20] sm:$0xff]
                %723 = vst [vmem:[%s713 + $0x20] sm:$0xff] %v722
                %v724 = vld [vmem:[%s712 + $0x28] sm:$0xff]
                %725 = vst [vmem:[%s713 + $0x28] sm:$0xff] %v724
                %v726 = vld [vmem:[%s712 + $0x30] sm:$0xff]
                %727 = vst [vmem:[%s713 + $0x30] sm:$0xff] %v726
                %v728 = vld [vmem:[%s712 + $0x38] sm:$0xff]
                %729 = vst [vmem:[%s713 + $0x38] sm:$0xff] %v728
                %v730 = vld [vmem:[%s712 + $0x40] sm:$0xff]
                %731 = vst [vmem:[%s713 + $0x40] sm:$0xff] %v730
                %v732 = vld [vmem:[%s712 + $0x48] sm:$0xff]
                %733 = vst [vmem:[%s713 + $0x48] sm:$0xff] %v732
                %v734 = vld [vmem:[%s712 + $0x50] sm:$0xff]
                %735 = vst [vmem:[%s713 + $0x50] sm:$0xff] %v734
                %v736 = vld [vmem:[%s712 + $0x58] sm:$0xff]
                %737 = vst [vmem:[%s713 + $0x58] sm:$0xff] %v736
                %v738 = vld [vmem:[%s712 + $0x60] sm:$0xff]
                %739 = vst [vmem:[%s713 + $0x60] sm:$0xff] %v738
                %v740 = vld [vmem:[%s712 + $0x68] sm:$0xff]
                %741 = vst [vmem:[%s713 + $0x68] sm:$0xff] %v740
                %v742 = vld [vmem:[%s712 + $0x70] sm:$0xff]
                %743 = vst [vmem:[%s713 + $0x70] sm:$0xff] %v742
                %v744 = vld [vmem:[%s712 + $0x78] sm:$0xff]
                %745 = vst [vmem:[%s713 + $0x78] sm:$0xff] %v744
                %s746 = sadd.s32 1, %s711
                %p747 = scmp.ge.s32.totalorder %s746, %s704
                %s748 = scalar_select %p747, 0, %s746
                %s749 = smul.u32 %s748, 128
                %s750 = smul.u32 %s748, 128
                %s751 = scalar_lea.vmem %s684, %s749 [#allocation2]
                %s752 = scalar_lea.vmem %s695, %s750
              $region61: #{two_layer_preact_resnet_linear.1} parent=55 // loop_footer
                %s708 = sadd.s32 %s706, 1
              $region62: #{two_layer_preact_resnet_linear.1} parent=55 // loop_footer_branch
                %705 = sbr.rel target = $region58
              $region63: #{two_layer_preact_resnet_linear.1} parent=55 // loop_exit
                _
              %s753 = sshrl.u32 %s691, 4
              %s754 = sand.u32 %s691, 15
              %s755 = smul.u32 %s753, 16
              %s756 = smul.u32 8, %s755
              %s757 = scalar_lea.vmem %s684, %s756 [#allocation2]
              %s758 = smul.u32 8, %s755
              %s759 = scalar_lea.vmem %s695, %s758
              // While loop
              $region64: #{two_layer_preact_resnet_linear.1} parent=55 // loop_pre_header
                _
              $region65: #{two_layer_preact_resnet_linear.1} parent=55 // loop_header
                %s761 = sphi 0, %s763
                %p762 = scmp.ge.s32.totalorder %s761, %s754
                %s766 = sphi 0, %s773
                %s767 = sphi %s757, %s776
                %s768 = sphi %s759, %s777
              $region66: #{two_layer_preact_resnet_linear.1} parent=55 // loop_header_branch
                %765 = sbr.rel (%p762) target = $region70
              $region67: #{two_layer_preact_resnet_linear.1} parent=55 // loop_body
                %v769 = vld [vmem:[%s767] sm:$0xff]
                %770 = vst [vmem:[%s768] sm:$0xff] %v769
                %s771 = sadd.s32 1, %s766
                %p772 = scmp.ge.s32.totalorder %s771, %s754
                %s773 = scalar_select %p772, 0, %s771
                %s774 = smul.u32 %s773, 8
                %s775 = smul.u32 %s773, 8
                %s776 = scalar_lea.vmem %s757, %s774 [#allocation2]
                %s777 = scalar_lea.vmem %s759, %s775
              $region68: #{two_layer_preact_resnet_linear.1} parent=55 // loop_footer
                %s763 = sadd.s32 %s761, 1
              $region69: #{two_layer_preact_resnet_linear.1} parent=55 // loop_footer_branch
                %760 = sbr.rel target = $region65
              $region70: #{two_layer_preact_resnet_linear.1} parent=55 // loop_exit
                _
            $region56: #{two_layer_preact_resnet_linear.1} parent=47 // pred_fallthru
              _
          $region48: #{two_layer_preact_resnet_linear.1} parent=43 // pred_fallthru
            _
          %856 = vnop
        $region44: #{two_layer_preact_resnet_linear.1} parent=39 // pred_fallthru
          _
      $region40: #{two_layer_preact_resnet_linear.1} parent=5 // pred_fallthru
        _
      %p857 = scmp.le.s32.totalorder 2, %s11
      // Predicated region
      $region93: #{two_layer_preact_resnet_linear.1} parent=5 // pred_check
        %p858 = pneg %p857
      $region94: #{two_layer_preact_resnet_linear.1} parent=5 // pred_check_branch
        %860 = sbr.rel (%p858) target = $region96
      $region95: #{two_layer_preact_resnet_linear.1} parent=5 // pred_region
        %s861 = ssub.s32 %s11, 2
        // Predicated region
        $region97: #{two_layer_preact_resnet_linear.1} parent=95 // pred_check
          %p862 = pneg %p150
        $region98: #{two_layer_preact_resnet_linear.1} parent=95 // pred_check_branch
          %864 = sbr.rel (%p862) target = $region100
        $region99: #{two_layer_preact_resnet_linear.1} parent=95 // pred_region
          %s865 = sand.u32 %s135, 1
          %s866 = sand.u32 %s135, 1
          %s867 = smul.addr %s866, 128
          %s868 = scalar_lea.vmem [#allocation2], %s867
        $region100: #{two_layer_preact_resnet_linear.1} parent=95 // pred_fallthru
          _
      $region96: #{two_layer_preact_resnet_linear.1} parent=5 // pred_fallthru
        _
    $region6: #{two_layer_preact_resnet_linear.1} parent=1 // loop_footer
      %s15 = sadd.s32 1, %s11
    $region7: #{two_layer_preact_resnet_linear.1} parent=1 // loop_footer_branch
      %10 = sbr.rel target = $region3
    $region8: #{two_layer_preact_resnet_linear.1} parent=1 // loop_exit
      _

</llo_original>
